<compile_context>
chip_gen: v7x
topology: tpu7x:2x2x1
jax: 0.10.0
libtpu: 0.0.40
codegen_flags: <defaults>
</compile_context>

<pallas_src>
import functools

import jax
import jax.numpy as jnp
import numpy as np
from jax.experimental import pallas as pl
from jax.experimental.pallas import tpu as pltpu

_HALO = 8  # halo rows kept sublane-aligned; only rows 0..TL+1 of the halo are used


def _round_up(x, m):
    return (x + m - 1) // m * m


def _auto_seq_tile(seq_len, batch_tile, target_rows=2048, max_tile=1024):
    """Pick TL so Bt*TL ~= target_rows MXU rows, capped by max_tile and the sequence."""
    tl = -(-target_rows // max(batch_tile, 1))
    tl = max(16, min(tl, max_tile))
    tl = _round_up(tl, 16)
    return min(tl, _round_up(seq_len, 16))


def sentiment_kernel(x_ref, wconv_ref, bconv_ref, wdec_ref, bdec_ref,
                     out_ref, maxacc_ref, *, batch_tile, seq_tile, seq_len, padded_len):
    """One grid step = one (batch_tile, seq_tile) slab.

    x_ref:     (1, Bt, TL+8, E)  halo embedding tile (compute dtype); row j = x[t*TL+j-1]
    wconv_ref: (3, E, F)         conv tap weights, wconv[k][e,f] = W_conv[f,e,k]
    bconv_ref: (1, F)            conv bias (f32)
    wdec_ref:  (F, Labp)         decoder weights, label dim padded to 128 (f32)
    bdec_ref:  (1, Labp)         decoder bias (f32)
    out_ref:   (1, Bt, Labp)     logits (f32), written on the last seq step only
    maxacc_ref:(Bt, F)           running global-max scratch (f32), private per batch tile
    """
    ti = pl.program_id(1)
    Bt, TL = batch_tile, seq_tile

    @pl.when(ti == 0)
    def _init():
        maxacc_ref[...] = jnp.full(maxacc_ref.shape, -jnp.inf, jnp.float32)

    h = x_ref[0]                                  # (Bt, TL+8, E)
    E = h.shape[-1]
    F = wconv_ref.shape[-1]

    # Conv1d(k=3, pad=1) as 3 accumulating tap matmuls on shifted slices of the halo
    # tile: output position p = ti*TL + j uses rows j, j+1, j+2 (= x[p-1], x[p], x[p+1]).
    acc = jnp.dot(h[:, 0:TL, :].reshape(Bt * TL, E), wconv_ref[0],
                  preferred_element_type=jnp.float32)
    acc += jnp.dot(h[:, 1:TL + 1, :].reshape(Bt * TL, E), wconv_ref[1],
                   preferred_element_type=jnp.float32)
    acc += jnp.dot(h[:, 2:TL + 2, :].reshape(Bt * TL, E), wconv_ref[2],
                   preferred_element_type=jnp.float32)
    acc = jnp.maximum(acc + bconv_ref[...], 0.0)  # bias + ReLU in f32
    acc = acc.reshape(Bt, TL, F)

    # Mask sequence-padding positions (>= L) to 0 before pooling.  Safe because the
    # global max of ReLU outputs is always >= 0.  Skipped when L is a tile multiple.
    if padded_len > seq_len:
        pos = ti * TL + jax.lax.broadcasted_iota(jnp.int32, (TL, 1), 0)
        acc = jnp.where((pos < seq_len)[None, :, :], acc, 0.0)

    # Per-batch max over this tile (single XLU reduce), folded into the running max.
    maxacc_ref[...] = jnp.maximum(maxacc_ref[...], jnp.max(acc, axis=1))

    @pl.when(ti == pl.num_programs(1) - 1)
    def _finalize():
        pooled = maxacc_ref[...]                                   # (Bt, F) f32
        logits = jnp.dot(pooled, wdec_ref[...],
                         preferred_element_type=jnp.float32) + bdec_ref[...]
        out_ref[0] = logits.astype(out_ref.dtype)


def sentiment_forward(inputs, embed_weight, conv_w, conv_b, dec_w, dec_b,
                      *, compute_dtype=jnp.bfloat16, seq_tile=None, batch_tile=None,
                      vmem_limit_bytes=None):
    """inputs: (B, L) int32 token ids.  Returns (B, labels) f32 logits."""
    # Embedding lookup (frozen nn.Embedding) stays as a wrapper-side gather.
    emb = jnp.take(embed_weight, inputs, axis=0)                   # (B, L, E) f32
    B, L, E = emb.shape
    Fn, E_w, K = conv_w.shape
    labels = dec_w.shape[0]
    assert E_w == E
    assert K == 3, "kernel assumes Conv1d(kernel=3, padding=1)"

    # --- batch tiling (parallel grid axis; engages both TensorCores on v7x) ---
    Bt = B if batch_tile is None else max(1, min(batch_tile, B))
    nB = -(-B // Bt)
    Bp = nB * Bt

    # --- sequence tiling (arbitrary grid axis carrying the running max) ---
    if seq_tile is None:
        TL = _auto_seq_tile(L, Bt)
    else:
        TL = min(_round_up(seq_tile, 16), _round_up(L, 16))
    Lp = _round_up(L, TL)
    nT = Lp // TL

    # --- halo tiles: xp index i holds x[i-1]; zeros outside [1, L+1) give the conv's
    #     zero padding at both sequence ends.  Tile t = xp[:, t*TL : t*TL+TL+HALO, :].
    xp = jnp.pad(emb, ((0, Bp - B), (1, Lp + _HALO - 1 - L), (0, 0)))
    x_tiles = jnp.stack([xp[:, t * TL: t * TL + TL + _HALO, :] for t in range(nT)],
                        axis=0).astype(compute_dtype)              # (nT, Bp, TL+8, E)

    # --- weights: conv taps as (K, E, F); decoder kept in f32, label dim padded to 128
    wconv = jnp.transpose(conv_w, (2, 1, 0)).astype(compute_dtype)  # [k, e, f] = W[f,e,k]
    bconv = conv_b.reshape(1, Fn).astype(jnp.float32)
    Labp = _round_up(labels, 128)
    wdec = jnp.pad(dec_w.T, ((0, 0), (0, Labp - labels))).astype(jnp.float32)
    bdec = jnp.pad(dec_b.reshape(1, labels),
                   ((0, 0), (0, Labp - labels))).astype(jnp.float32)

    kernel = functools.partial(sentiment_kernel, batch_tile=Bt, seq_tile=TL,
                               seq_len=L, padded_len=Lp)

    cp_kwargs = dict(dimension_semantics=("parallel", "arbitrary"))
    if vmem_limit_bytes is not None:  # only needed if tiles are pushed past VMEM defaults
        cp_kwargs["vmem_limit_bytes"] = int(vmem_limit_bytes)

    out = pl.pallas_call(
        kernel,
        out_shape=jax.ShapeDtypeStruct((nB, Bt, Labp), jnp.float32),
        grid_spec=pltpu.PrefetchScalarGridSpec(
            num_scalar_prefetch=0,
            grid=(nB, nT),
            in_specs=[
                pl.BlockSpec((1, Bt, TL + _HALO, E), lambda bi, ti: (ti, bi, 0, 0)),
                pl.BlockSpec((K, E, Fn), lambda bi, ti: (0, 0, 0)),
                pl.BlockSpec((1, Fn), lambda bi, ti: (0, 0)),
                pl.BlockSpec((Fn, Labp), lambda bi, ti: (0, 0)),
                pl.BlockSpec((1, Labp), lambda bi, ti: (0, 0)),
            ],
            out_specs=pl.BlockSpec((1, Bt, Labp), lambda bi, ti: (bi, 0, 0)),
            scratch_shapes=[pltpu.VMEM((Bt, Fn), jnp.float32)],
        ),
        compiler_params=pltpu.CompilerParams(**cp_kwargs),
    )(x_tiles, wconv, bconv, wdec, bdec)

    return out.reshape(Bp, Labp)[:B, :labels]


def ref_forward(inputs, embed_weight, conv_w, conv_b, dec_w, dec_b):
    """Pure-JAX reference mirroring the PyTorch forward (NCW conv)."""
    emb = jnp.take(embed_weight, inputs, axis=0)                   # (B, L, E)
    x = jnp.transpose(emb, (0, 2, 1))                              # (B, E, L)
    conv = jax.lax.conv_general_dilated(
        x, conv_w, window_strides=(1,), padding=((1, 1),),
        dimension_numbers=("NCH", "OIH", "NCH"))
    conv = jnp.maximum(conv + conv_b[None, :, None], 0.0)          # ReLU
    pooled = jnp.max(conv, axis=2)                                 # global max pool
    return pooled @ dec_w.T + dec_b


if __name__ == "__main__":
    # Small, module-consistent shapes.  seq_len=40 is deliberately not a multiple of
    # 16 so the masked ragged-tail path is exercised.
    vocab = 50
    embed_size = 32
    num_filter = 128
    filter_size = 3
    labels = 2
    batch = 2
    seq_len = 40

    key = jax.random.PRNGKey(0)
    k1, k2, k3, k4, k5, k6 = jax.random.split(key, 6)

    embed_weight = 0.1 * jax.random.normal(k1, (vocab, embed_size), jnp.float32)
    conv_w = 0.1 * jax.random.normal(k2, (num_filter, embed_size, filter_size), jnp.float32)
    conv_b = 0.1 * jax.random.normal(k3, (num_filter,), jnp.float32)
    dec_w = 0.1 * jax.random.normal(k4, (labels, num_filter), jnp.float32)
    dec_b = 0.1 * jax.random.normal(k5, (labels,), jnp.float32)
    inputs = jax.random.randint(k6, (batch, seq_len), 0, vocab, dtype=jnp.int32)

    ref = ref_forward(inputs, embed_weight, conv_w, conv_b, dec_w, dec_b)

    # f32 path, auto (large) tile: single-step grid, exact match with the reference.
    out_f32 = jax.block_until_ready(
        sentiment_forward(inputs, embed_weight, conv_w, conv_b, dec_w, dec_b,
                          compute_dtype=jnp.float32))
    np.testing.assert_allclose(np.asarray(out_f32), np.asarray(ref), rtol=1e-4, atol=1e-4)

    # f32 path, small tiles + batch tiling: exercises the multi-step running max,
    # the ragged-tail mask, and the parallel batch-tile axis (nB=2, nT=3).
    out_tiled = jax.block_until_ready(
        sentiment_forward(inputs, embed_weight, conv_w, conv_b, dec_w, dec_b,
                          compute_dtype=jnp.float32, seq_tile=16, batch_tile=1))
    np.testing.assert_allclose(np.asarray(out_tiled), np.asarray(ref), rtol=1e-4, atol=1e-4)

    # Default bf16-matmul path: f32 accumulation, looser tolerance.
    out_bf16 = jax.block_until_ready(
        sentiment_forward(inputs, embed_weight, conv_w, conv_b, dec_w, dec_b,
                          compute_dtype=jnp.bfloat16))
    np.testing.assert_allclose(np.asarray(out_bf16), np.asarray(ref), rtol=2e-2, atol=2e-2)

    print("KERNEL_OK")
</pallas_src>

<mosaic_0001>
module attributes {stable_mosaic.version = 11 : i64} {
  func.func @sentiment_kernel(%arg0: i32, %arg1: i32, %arg2: memref<1x2x56x32xf32, #tpu.memory_space<vmem>>, %arg3: memref<3x32x128xf32, #tpu.memory_space<vmem>>, %arg4: memref<1x128xf32, #tpu.memory_space<vmem>>, %arg5: memref<128x128xf32, #tpu.memory_space<vmem>>, %arg6: memref<1x128xf32, #tpu.memory_space<vmem>>, %arg7: memref<1x2x128xf32, #tpu.memory_space<vmem>>, %arg8: memref<2x128xf32, #tpu.memory_space<vmem>>) attributes {dimension_semantics = [#tpu.dimension_semantics<parallel>, #tpu.dimension_semantics<arbitrary>], iteration_bounds = array<i64: 1, 1>, scalar_prefetch = 0 : i64, scratch_operands = 1 : i64, tpu.core_type = #tpu.core_type<tc>, window_params = [{transform_indices = @transform_0, window_bounds = array<i64: 1, 2, 56, 32>}, {pipeline_mode = #tpu.pipeline_mode<synchronous>, transform_indices = @transform_1, window_bounds = array<i64: 3, 32, 128>}, {pipeline_mode = #tpu.pipeline_mode<synchronous>, transform_indices = @transform_2, window_bounds = array<i64: 1, 128>}, {pipeline_mode = #tpu.pipeline_mode<synchronous>, transform_indices = @transform_3, window_bounds = array<i64: 128, 128>}, {pipeline_mode = #tpu.pipeline_mode<synchronous>, transform_indices = @transform_4, window_bounds = array<i64: 1, 128>}, {transform_indices = @transform_5, window_bounds = array<i64: 1, 2, 128>}]} {
    %c0_i32 = arith.constant 0 : i32
    %0 = arith.cmpi eq, %arg1, %c0_i32 : i32
    %1 = arith.extui %0 : i1 to i32
    %c0_i32_0 = arith.constant 0 : i32
    %2 = arith.cmpi ne, %1, %c0_i32_0 : i32
    scf.if %2 {
      %cst_24 = arith.constant 0xFF800000 : f32
      %46 = vector.broadcast %cst_24 : f32 to vector<2x128xf32>
      %c0_25 = arith.constant 0 : index
      %c0_26 = arith.constant 0 : index
      %47 = vector.load %arg8[%c0_25, %c0_26] : memref<2x128xf32, #tpu.memory_space<vmem>>, vector<2x128xf32>
      tpu.vector_store %arg8[%c0_25, %c0_26], %46 {strides = array<i32>} : memref<2x128xf32, #tpu.memory_space<vmem>>, vector<2x128xf32>,
    } else {
    }
    %c0 = arith.constant 0 : index
    %c0_1 = arith.constant 0 : index
    %c0_2 = arith.constant 0 : index
    %c0_3 = arith.constant 0 : index
    %3 = vector.load %arg2[%c0, %c0_1, %c0_2, %c0_3] : memref<1x2x56x32xf32, #tpu.memory_space<vmem>>, vector<1x2x56x32xf32>
    %4 = vector.shape_cast %3 : vector<1x2x56x32xf32> to vector<2x56x32xf32>
    %5 = vector.extract_strided_slice %4 {offsets = [0, 0, 0], sizes = [2, 48, 32], strides = [1, 1, 1]} : vector<2x56x32xf32> to vector<2x48x32xf32>
    %6 = vector.shape_cast %5 : vector<2x48x32xf32> to vector<96x32xf32>
    %c0_4 = arith.constant 0 : index
    %c0_5 = arith.constant 0 : index
    %c0_6 = arith.constant 0 : index
    %7 = vector.load %arg3[%c0_4, %c0_5, %c0_6] : memref<3x32x128xf32, #tpu.memory_space<vmem>>, vector<1x32x128xf32>
    %8 = vector.shape_cast %7 : vector<1x32x128xf32> to vector<32x128xf32>
    %cst = arith.constant dense<0.000000e+00> : vector<96x128xf32>
    %9 = tpu.matmul %6, %8, %cst {dimension_numbers = #tpu.dot_dimension_numbers<[1], [0], [0], [1], [0, 0, 1, 1], [], []>} : vector<96x32xf32>, vector<32x128xf32>, vector<96x128xf32> -> vector<96x128xf32>
    %10 = vector.extract_strided_slice %4 {offsets = [0, 1, 0], sizes = [2, 48, 32], strides = [1, 1, 1]} : vector<2x56x32xf32> to vector<2x48x32xf32>
    %11 = vector.shape_cast %10 : vector<2x48x32xf32> to vector<96x32xf32>
    %c1 = arith.constant 1 : index
    %c0_7 = arith.constant 0 : index
    %c0_8 = arith.constant 0 : index
    %12 = vector.load %arg3[%c1, %c0_7, %c0_8] : memref<3x32x128xf32, #tpu.memory_space<vmem>>, vector<1x32x128xf32>
    %13 = vector.shape_cast %12 : vector<1x32x128xf32> to vector<32x128xf32>
    %cst_9 = arith.constant dense<0.000000e+00> : vector<96x128xf32>
    %14 = tpu.matmul %11, %13, %cst_9 {dimension_numbers = #tpu.dot_dimension_numbers<[1], [0], [0], [1], [0, 0, 1, 1], [], []>} : vector<96x32xf32>, vector<32x128xf32>, vector<96x128xf32> -> vector<96x128xf32>
    %15 = arith.addf %9, %14 : vector<96x128xf32>
    %16 = vector.extract_strided_slice %4 {offsets = [0, 2, 0], sizes = [2, 48, 32], strides = [1, 1, 1]} : vector<2x56x32xf32> to vector<2x48x32xf32>
    %17 = vector.shape_cast %16 : vector<2x48x32xf32> to vector<96x32xf32>
    %c2 = arith.constant 2 : index
    %c0_10 = arith.constant 0 : index
    %c0_11 = arith.constant 0 : index
    %18 = vector.load %arg3[%c2, %c0_10, %c0_11] : memref<3x32x128xf32, #tpu.memory_space<vmem>>, vector<1x32x128xf32>
    %19 = vector.shape_cast %18 : vector<1x32x128xf32> to vector<32x128xf32>
    %cst_12 = arith.constant dense<0.000000e+00> : vector<96x128xf32>
    %20 = tpu.matmul %17, %19, %cst_12 {dimension_numbers = #tpu.dot_dimension_numbers<[1], [0], [0], [1], [0, 0, 1, 1], [], []>} : vector<96x32xf32>, vector<32x128xf32>, vector<96x128xf32> -> vector<96x128xf32>
    %21 = arith.addf %15, %20 : vector<96x128xf32>
    %c0_13 = arith.constant 0 : index
    %c0_14 = arith.constant 0 : index
    %22 = vector.load %arg4[%c0_13, %c0_14] : memref<1x128xf32, #tpu.memory_space<vmem>>, vector<1x128xf32>
    %23 = vector.broadcast %22 : vector<1x128xf32> to vector<96x128xf32>
    %24 = arith.addf %21, %23 : vector<96x128xf32>
    %cst_15 = arith.constant 0.000000e+00 : f32
    %25 = vector.broadcast %cst_15 : f32 to vector<96x128xf32>
    %26 = arith.maximumf %24, %25 : vector<96x128xf32>
    %27 = vector.shape_cast %26 : vector<96x128xf32> to vector<2x48x128xf32>
    %c48_i32 = arith.constant 48 : i32
    %28 = arith.muli %arg1, %c48_i32 : i32
    %29 = tpu.iota {dimensions = array<i32: 0>} : vector<48x1xi32>
    %30 = vector.broadcast %28 : i32 to vector<48x1xi32>
    %31 = arith.addi %30, %29 : vector<48x1xi32>
    %c40_i32 = arith.constant 40 : i32
    %32 = vector.broadcast %c40_i32 : i32 to vector<48x1xi32>
    %33 = arith.cmpi slt, %31, %32 : vector<48x1xi32>
    %34 = vector.shape_cast %33 : vector<48x1xi1> to vector<1x48x1xi1>
    %cst_16 = arith.constant 0.000000e+00 : f32
    %35 = vector.shape_cast %34 : vector<1x48x1xi1> to vector<1x48x1xi1>
    %36 = vector.broadcast %35 : vector<1x48x1xi1> to vector<2x48x128xi1>
    %37 = vector.broadcast %cst_16 : f32 to vector<2x48x128xf32>
    %38 = arith.select %36, %27, %37 : vector<2x48x128xi1>, vector<2x48x128xf32>
    %c0_17 = arith.constant 0 : index
    %c0_18 = arith.constant 0 : index
    %39 = vector.load %arg8[%c0_17, %c0_18] : memref<2x128xf32, #tpu.memory_space<vmem>>, vector<2x128xf32>
    %cst_19 = arith.constant dense<0xFF800000> : vector<2x128xf32>
    %40 = vector.multi_reduction <maximumf>, %38, %cst_19 [1] : vector<2x48x128xf32> to vector<2x128xf32>
    %41 = arith.maximumf %39, %40 : vector<2x128xf32>
    %c0_20 = arith.constant 0 : index
    %c0_21 = arith.constant 0 : index
    %42 = vector.load %arg8[%c0_20, %c0_21] : memref<2x128xf32, #tpu.memory_space<vmem>>, vector<2x128xf32>
    tpu.vector_store %arg8[%c0_20, %c0_21], %41 {strides = array<i32>} : memref<2x128xf32, #tpu.memory_space<vmem>>, vector<2x128xf32>,
    %c0_i32_22 = arith.constant 0 : i32
    %43 = arith.cmpi eq, %arg1, %c0_i32_22 : i32
    %44 = arith.extui %43 : i1 to i32
    %c0_i32_23 = arith.constant 0 : i32
    %45 = arith.cmpi ne, %44, %c0_i32_23 : i32
    scf.if %45 {
      %c0_24 = arith.constant 0 : index
      %c0_25 = arith.constant 0 : index
      %46 = vector.load %arg8[%c0_24, %c0_25] : memref<2x128xf32, #tpu.memory_space<vmem>>, vector<2x128xf32>
      %c0_26 = arith.constant 0 : index
      %c0_27 = arith.constant 0 : index
      %47 = vector.load %arg5[%c0_26, %c0_27] : memref<128x128xf32, #tpu.memory_space<vmem>>, vector<128x128xf32>
      %cst_28 = arith.constant dense<0.000000e+00> : vector<2x128xf32>
      %48 = tpu.matmul %46, %47, %cst_28 {dimension_numbers = #tpu.dot_dimension_numbers<[1], [0], [0], [1], [0, 0, 1, 1], [], []>} : vector<2x128xf32>, vector<128x128xf32>, vector<2x128xf32> -> vector<2x128xf32>
      %c0_29 = arith.constant 0 : index
      %c0_30 = arith.constant 0 : index
      %49 = vector.load %arg6[%c0_29, %c0_30] : memref<1x128xf32, #tpu.memory_space<vmem>>, vector<1x128xf32>
      %50 = vector.broadcast %49 : vector<1x128xf32> to vector<2x128xf32>
      %51 = arith.addf %48, %50 : vector<2x128xf32>
      %c0_31 = arith.constant 0 : index
      %c0_32 = arith.constant 0 : index
      %c0_33 = arith.constant 0 : index
      %52 = vector.load %arg7[%c0_31, %c0_32, %c0_33] : memref<1x2x128xf32, #tpu.memory_space<vmem>>, vector<1x2x128xf32>
      %53 = vector.shape_cast %52 : vector<1x2x128xf32> to vector<2x128xf32>
      %54 = vector.shape_cast %51 : vector<2x128xf32> to vector<1x2x128xf32>
      tpu.vector_store %arg7[%c0_31, %c0_32, %c0_33], %54 {strides = array<i32>} : memref<1x2x128xf32, #tpu.memory_space<vmem>>, vector<1x2x128xf32>,
    } else {
    }
    return
  }
  func.func @transform_0(%arg0: i32, %arg1: i32) -> (i32, i32, i32, i32) {
    %c0_i32 = arith.constant 0 : i32
    %c0_i32_0 = arith.constant 0 : i32
    %c0_i32_1 = arith.constant 0 : i32
    return %arg1, %arg0, %c0_i32, %c0_i32_0 : i32, i32, i32, i32
  }
  func.func @transform_1(%arg0: i32, %arg1: i32) -> (i32, i32, i32) {
    %c0_i32 = arith.constant 0 : i32
    %c0_i32_0 = arith.constant 0 : i32
    %c0_i32_1 = arith.constant 0 : i32
    %c0_i32_2 = arith.constant 0 : i32
    return %c0_i32, %c0_i32_0, %c0_i32_1 : i32, i32, i32
  }
  func.func @transform_2(%arg0: i32, %arg1: i32) -> (i32, i32) {
    %c0_i32 = arith.constant 0 : i32
    %c0_i32_0 = arith.constant 0 : i32
    %c0_i32_1 = arith.constant 0 : i32
    return %c0_i32, %c0_i32_0 : i32, i32
  }
  func.func @transform_3(%arg0: i32, %arg1: i32) -> (i32, i32) {
    %c0_i32 = arith.constant 0 : i32
    %c0_i32_0 = arith.constant 0 : i32
    %c0_i32_1 = arith.constant 0 : i32
    return %c0_i32, %c0_i32_0 : i32, i32
  }
  func.func @transform_4(%arg0: i32, %arg1: i32) -> (i32, i32) {
    %c0_i32 = arith.constant 0 : i32
    %c0_i32_0 = arith.constant 0 : i32
    %c0_i32_1 = arith.constant 0 : i32
    return %c0_i32, %c0_i32_0 : i32, i32
  }
  func.func @transform_5(%arg0: i32, %arg1: i32) -> (i32, i32, i32) {
    %c0_i32 = arith.constant 0 : i32
    %c0_i32_0 = arith.constant 0 : i32
    %c0_i32_1 = arith.constant 0 : i32
    return %arg0, %c0_i32, %c0_i32_0 : i32, i32, i32
  }
}

</mosaic_0001>

<llo_original>
// kernel: tpu_custom_call.1
$region0: #{tpu_custom_call.1}
  #allocation0 [shape = 'u32[]', space=smem, size = 0x4, offset = 0x4, fixed_abs, tag = 'smem constant byte address 0x4 - core index']
  #allocation1 [shape = 'u32[144,128]{1,0:T(1,128)}', space=vmem, size = 0x12000, scoped, tag = 'internal scratch']
  #allocation2 [shape = 'f32[2,128]{1,0:T(2,128)}', space=vmem, size = 0x400, scoped, tag = 'scratch operand']
  %s0 = inlined_call_operand.vmem [shape: f32[1,2,56,32], index: 0, kind: input, shape index: {}]
  %s1 = inlined_call_operand.hbm [shape: f32[3,32,128], index: 1, kind: input, shape index: {}]
  %s2 = inlined_call_operand.vmem [shape: f32[1,128], index: 2, kind: input, shape index: {}]
  %s3 = inlined_call_operand.vmem [shape: f32[128,128], index: 3, kind: input, shape index: {}]
  %s4 = inlined_call_operand.vmem [shape: f32[1,128], index: 4, kind: input, shape index: {}]
  %s5 = inlined_call_operand.hbm [shape: f32[1,2,128], index: 5, kind: output, shape index: {}]
  %s6 = sld [smem:[#allocation0]]
  $region42: #{tpu_custom_call.1} parent=0
    _
  %s8 = ssub.s32 1, %s6
  %s9 = scalar_select 0, %s8, %s6
  $region1: #{tpu_custom_call.1} parent=0
    #allocation3 [shape = 'u8[49152]{0}', space=vmem, size = 0xc000, scoped, tag = 'input window, operand 1, single buffered']
    #allocation4 [shape = 's32[1]{0}', space=sflag, size = 0x4, scoped, tag = 'scoped memory for tpu_custom_call.1']
    #allocation5 [shape = 's32[1]{0}', space=sflag, size = 0x4, scoped, tag = 'scoped memory for tpu_custom_call.1']
    #allocation6 [shape = 'u8[1024]{0}', space=vmem, size = 0x400, scoped, tag = 'output window, operand 0, single buffered']
    %10 = vsyncpa [#allocation4], 0
    %11 = vsyncpa [#allocation5], 0
    // Predicated region
    $region2: #{tpu_custom_call.1} parent=1 // pred_check
      _
    $region3: #{tpu_custom_call.1} parent=1 // pred_check_branch
      %13 = sbr.rel (0) target = $region5
    $region4: #{tpu_custom_call.1} parent=1 // pred_region
      _
    $region5: #{tpu_custom_call.1} parent=1 // pred_fallthru
      _
    // Predicated region
    $region6: #{tpu_custom_call.1} parent=1 // pred_check
      _
    $region7: #{tpu_custom_call.1} parent=1 // pred_check_branch
      %15 = sbr.rel (0) target = $region9
    $region8: #{tpu_custom_call.1} parent=1 // pred_region
      %s17 = ssub.s32 1536, 1536
      %18 = vsyncadd [#allocation4], %s17
      %s19 = sshll.u32 [#allocation3], 4
      %s20 = int_to_ptr.vmem [resolvable:$true] %s19
      %25 = dma.hbm_to_vmem [thread:$0]  %s1, 1536, %s20, [#allocation4], 128, 128, 8
    $region9: #{tpu_custom_call.1} parent=1 // pred_fallthru
      _
    // Predicated region
    $region10: #{tpu_custom_call.1} parent=1 // pred_check
      _
    $region11: #{tpu_custom_call.1} parent=1 // pred_check_branch
      %27 = sbr.rel (0) target = $region13
    $region12: #{tpu_custom_call.1} parent=1 // pred_region
      _
    $region13: #{tpu_custom_call.1} parent=1 // pred_fallthru
      _
    // Predicated region
    $region14: #{tpu_custom_call.1} parent=1 // pred_check
      _
    $region15: #{tpu_custom_call.1} parent=1 // pred_check_branch
      %29 = sbr.rel (0) target = $region17
    $region16: #{tpu_custom_call.1} parent=1 // pred_region
      _
    $region17: #{tpu_custom_call.1} parent=1 // pred_fallthru
      _
    // Predicated region
    $region18: #{tpu_custom_call.1} parent=1 // pred_check
      _
    $region19: #{tpu_custom_call.1} parent=1 // pred_check_branch
      %31 = sbr.rel (0) target = $region21
    $region20: #{tpu_custom_call.1} parent=1 // pred_region
      _
    $region21: #{tpu_custom_call.1} parent=1 // pred_fallthru
      _
    // Predicated region
    $region22: #{tpu_custom_call.1} parent=1 // pred_check
      _
    $region23: #{tpu_custom_call.1} parent=1 // pred_check_branch
      %33 = sbr.rel (0) target = $region25
    $region24: #{tpu_custom_call.1} parent=1 // pred_region
      %34 = dma.done [#allocation4], 1536
    $region25: #{tpu_custom_call.1} parent=1 // pred_fallthru
      _
    %p35 = scmp.eq.s32.totalorder 0, 0
    // Predicated region
    $region26: #{tpu_custom_call.1} parent=1 // pred_check
      %p36 = pneg %p35
    $region27: #{tpu_custom_call.1} parent=1 // pred_check_branch
      %38 = sbr.rel (%p36) target = $region29
    $region28: #{tpu_custom_call.1} parent=1 // pred_region
      %39 = vst [vmem:[#allocation2] sm:$0x3] -inf
    $region29: #{tpu_custom_call.1} parent=1 // pred_fallthru
      _
    %v40 = vld [vmem:[%s0] sm:$0xff]
    %v41 = vld [vmem:[%s0 + $0x8] sm:$0xff]
    %v42 = vld [vmem:[%s0 + $0x10] sm:$0xff]
    %v43 = vld [vmem:[%s0 + $0x18] sm:$0xff]
    %v44 = vld [vmem:[%s0 + $0x20] sm:$0xff]
    %v45 = vld [vmem:[%s0 + $0x28] sm:$0xff]
    %v46 = vld [vmem:[%s0 + $0x30] sm:$0xff]
    %v47 = vld [vmem:[%s0 + $0x38] sm:$0xff]
    %v48 = vld [vmem:[%s0 + $0x40] sm:$0xff]
    %v49 = vld [vmem:[%s0 + $0x48] sm:$0xff]
    %v50 = vld [vmem:[%s0 + $0x50] sm:$0xff]
    %v51 = vld [vmem:[%s0 + $0x58] sm:$0xff]
    %v52 = vld [vmem:[%s0 + $0x60] sm:$0xff]
    %v53 = vld [vmem:[%s0 + $0x68] sm:$0xff]
    %v54 = vld [vmem:[#allocation3] sm:$0xff]
    %v55 = vld [vmem:[#allocation3 + $0x8] sm:$0xff]
    %v56 = vld [vmem:[#allocation3 + $0x10] sm:$0xff]
    %v57 = vld [vmem:[#allocation3 + $0x18] sm:$0xff]
    %vm72 = vcmask 1046528
    %v73 = vrot.slane %v40, 1
    %v74 = vrot.slane %v41, 1
    %v75 = vsel %vm72, %v73, %v74
    %v76 = vrot.slane %v42, 1
    %v77 = vsel %vm72, %v74, %v76
    %v78 = vrot.slane %v43, 1
    %v79 = vsel %vm72, %v76, %v78
    %v80 = vrot.slane %v44, 1
    %v81 = vsel %vm72, %v78, %v80
    %v82 = vrot.slane %v45, 1
    %v83 = vsel %vm72, %v80, %v82
    %v84 = vrot.slane %v46, 1
    %v85 = vsel %vm72, %v82, %v84
    %v86 = vrot.slane %v47, 1
    %v87 = vrot.slane %v48, 1
    %v88 = vsel %vm72, %v86, %v87
    %v89 = vrot.slane %v49, 1
    %v90 = vsel %vm72, %v87, %v89
    %v91 = vrot.slane %v50, 1
    %v92 = vsel %vm72, %v89, %v91
    %v93 = vrot.slane %v51, 1
    %v94 = vsel %vm72, %v91, %v93
    %v95 = vrot.slane %v52, 1
    %v96 = vsel %vm72, %v93, %v95
    %v97 = vrot.slane %v53, 1
    %v98 = vsel %vm72, %v95, %v97
    %s99 = scalar_lea.vmem [#allocation3], 32
    %v100 = vld [vmem:[%s99] sm:$0xff]
    %v101 = vld [vmem:[%s99 + $0x8] sm:$0xff]
    %v102 = vld [vmem:[%s99 + $0x10] sm:$0xff]
    %v103 = vld [vmem:[%s99 + $0x18] sm:$0xff]
    %vm104 = vcmask 261120
    %v105 = vsel %vm104, %v75, 0
    %v107 = vsel %vm104, %v77, 0
    %v109 = vsel %vm104, %v79, 0
    %v111 = vsel %vm104, %v81, 0
    %v113 = vsel %vm104, %v83, 0
    %v115 = vsel %vm104, %v85, 0
    %v117 = vsel %vm104, %v88, 0
    %v119 = vsel %vm104, %v90, 0
    %v121 = vsel %vm104, %v92, 0
    %v123 = vsel %vm104, %v94, 0
    %v125 = vsel %vm104, %v96, 0
    %v127 = vsel %vm104, %v98, 0
    %129 = vmatprep.subr.mxu0 0.0
    %130 = vmatpush1.msra.mxu0 %v100
    %131 = vmatprep.subr.mxu0 0.0
    %132 = vmatpush1.msra.mxu0 %v101
    %133 = vmatprep.subr.mxu0 0.0
    %134 = vmatpush1.msra.mxu0 %v102
    %135 = vmatprep.subr.mxu0 0.0
    %136 = vmatpush1.msra.mxu0 %v103
    %137 = vmatprep.subr.mxu0 0.0
    %138 = vmatpush1.msra.mxu0 0.0
    %139 = vmatprep.subr.mxu0 0.0
    %140 = vmatpush1.msra.mxu0 0.0
    %141 = vmatprep.subr.mxu0 0.0
    %142 = vmatpush1.msra.mxu0 0.0
    %143 = vmatprep.subr.mxu0 0.0
    %144 = vmatpush1.msra.mxu0 0.0
    %145 = vmatprep.subr.mxu0 0.0
    %146 = vmatpush1.msra.mxu0 0.0
    %147 = vmatprep.subr.mxu0 0.0
    %148 = vmatpush1.msra.mxu0 0.0
    %149 = vmatprep.subr.mxu0 0.0
    %150 = vmatpush1.msra.mxu0 0.0
    %151 = vmatprep.subr.mxu0 0.0
    %152 = vmatpush1.msra.mxu0 0.0
    %153 = vmatprep.subr.mxu0 0.0
    %154 = vmatpush1.msra.mxu0 0.0
    %155 = vmatprep.subr.mxu0 0.0
    %156 = vmatpush1.msra.mxu0 0.0
    %157 = vmatprep.subr.mxu0 0.0
    %158 = vmatpush1.msra.mxu0 0.0
    %159 = vmatprep.subr.mxu0 0.0
    %160 = vmatpush1.msra.mxu0 0.0
    %161 = vmatprep.subr.mxu0 0.0
    %162 = vmatpush1.msra.mxu0 0.0
    %163 = vmatprep.subr.mxu0 0.0
    %164 = vmatpush1.msra.mxu0 0.0
    %165 = vmatprep.subr.mxu0 0.0
    %166 = vmatpush1.msra.mxu0 0.0
    %167 = vmatprep.subr.mxu0 0.0
    %168 = vmatpush1.msra.mxu0 0.0
    %169 = vmatprep.subr.mxu0 0.0
    %170 = vmatpush1.msra.mxu0 0.0
    %171 = vmatprep.subr.mxu0 0.0
    %172 = vmatpush1.msra.mxu0 0.0
    %173 = vmatprep.subr.mxu0 0.0
    %174 = vmatpush1.msra.mxu0 0.0
    %175 = vmatprep.subr.mxu0 0.0
    %176 = vmatpush1.msra.mxu0 0.0
    %177 = vmatprep.subr.mxu0 0.0
    %178 = vmatpush1.msra.mxu0 0.0
    %179 = vmatprep.subr.mxu0 0.0
    %180 = vmatpush1.msra.mxu0 0.0
    %181 = vmatprep.subr.mxu0 0.0
    %182 = vmatpush1.msra.mxu0 0.0
    %183 = vmatprep.subr.mxu0 0.0
    %184 = vmatpush1.msra.mxu0 0.0
    %185 = vmatprep.subr.mxu0 0.0
    %186 = vmatpush1.msra.mxu0 0.0
    %187 = vmatprep.subr.mxu0 0.0
    %188 = vmatpush1.msra.mxu0 0.0
    %189 = vmatprep.subr.mxu0 0.0
    %190 = vmatpush1.msra.mxu0 0.0
    %191 = vmatprep.subr.mxu0 0.0
    %192 = vmatpush1.msra.mxu0 0.0
    %193 = vmatprep.mubr.f32.mxu0 0.0
    %194 = vmatmul.mubr.f32.gmra.mrb[0].mxu0 %v105
    %v195 = vpop.f32.mrb[0].mxu0
    %v196 = vadd.f32 0.0, %v195
    %v197 = vpop.f32.mrb[0].mxu0
    %198 = vmatprep.mubr.f32.mxu0 0.0
    %199 = vmatmul.mubr.f32.gmra.mrb[0].mxu0 %v107
    %v200 = vpop.f32.mrb[0].mxu0
    %v201 = vadd.f32 0.0, %v200
    %v202 = vpop.f32.mrb[0].mxu0
    %203 = vmatprep.mubr.f32.mxu0 0.0
    %204 = vmatmul.mubr.f32.gmra.mrb[0].mxu0 %v109
    %v205 = vpop.f32.mrb[0].mxu0
    %v206 = vadd.f32 0.0, %v205
    %v207 = vpop.f32.mrb[0].mxu0
    %208 = vmatprep.mubr.f32.mxu0 0.0
    %209 = vmatmul.mubr.f32.gmra.mrb[0].mxu0 %v111
    %v210 = vpop.f32.mrb[0].mxu0
    %v211 = vadd.f32 0.0, %v210
    %v212 = vpop.f32.mrb[0].mxu0
    %213 = vmatprep.mubr.f32.mxu0 0.0
    %214 = vmatmul.mubr.f32.gmra.mrb[0].mxu0 %v113
    %v215 = vpop.f32.mrb[0].mxu0
    %v216 = vadd.f32 0.0, %v215
    %v217 = vpop.f32.mrb[0].mxu0
    %218 = vmatprep.mubr.f32.mxu0 0.0
    %219 = vmatmul.mubr.f32.gmra.mrb[0].mxu0 %v115
    %v220 = vpop.f32.mrb[0].mxu0
    %v221 = vadd.f32 0.0, %v220
    %v222 = vpop.f32.mrb[0].mxu0
    %223 = vmatprep.mubr.f32.mxu0 0.0
    %224 = vmatmul.mubr.f32.gmra.mrb[0].mxu0 %v117
    %v225 = vpop.f32.mrb[0].mxu0
    %v226 = vadd.f32 0.0, %v225
    %v227 = vpop.f32.mrb[0].mxu0
    %228 = vmatprep.mubr.f32.mxu0 0.0
    %229 = vmatmul.mubr.f32.gmra.mrb[0].mxu0 %v119
    %v230 = vpop.f32.mrb[0].mxu0
    %v231 = vadd.f32 0.0, %v230
    %v232 = vpop.f32.mrb[0].mxu0
    %233 = vmatprep.mubr.f32.mxu0 0.0
    %234 = vmatmul.mubr.f32.gmra.mrb[0].mxu0 %v121
    %v235 = vpop.f32.mrb[0].mxu0
    %v236 = vadd.f32 0.0, %v235
    %v237 = vpop.f32.mrb[0].mxu0
    %238 = vmatprep.mubr.f32.mxu0 0.0
    %239 = vmatmul.mubr.f32.gmra.mrb[0].mxu0 %v123
    %v240 = vpop.f32.mrb[0].mxu0
    %v241 = vadd.f32 0.0, %v240
    %v242 = vpop.f32.mrb[0].mxu0
    %243 = vmatprep.mubr.f32.mxu0 0.0
    %244 = vmatmul.mubr.f32.gmra.mrb[0].mxu0 %v125
    %v245 = vpop.f32.mrb[0].mxu0
    %v246 = vadd.f32 0.0, %v245
    %v247 = vpop.f32.mrb[0].mxu0
    %248 = vmatprep.mubr.f32.mxu0 0.0
    %249 = vmatmul.mubr.f32.gmra.mrb[0].mxu0 %v127
    %v250 = vpop.f32.mrb[0].mxu0
    %v251 = vadd.f32 0.0, %v250
    %v252 = vpop.f32.mrb[0].mxu0
    %253 = vdwg.mxu0
    %v254 = vsel %vm104, %v40, 0
    %v256 = vsel %vm104, %v41, 0
    %v258 = vsel %vm104, %v42, 0
    %v260 = vsel %vm104, %v43, 0
    %v262 = vsel %vm104, %v44, 0
    %v264 = vsel %vm104, %v45, 0
    %v266 = vsel %vm104, %v47, 0
    %v268 = vsel %vm104, %v48, 0
    %v270 = vsel %vm104, %v49, 0
    %v272 = vsel %vm104, %v50, 0
    %v274 = vsel %vm104, %v51, 0
    %v276 = vsel %vm104, %v52, 0
    %278 = vmatprep.subr.mxu0 0.0
    %279 = vmatpush1.msra.mxu0 %v54
    %280 = vmatprep.subr.mxu0 0.0
    %281 = vmatpush1.msra.mxu0 %v55
    %282 = vmatprep.subr.mxu0 0.0
    %283 = vmatpush1.msra.mxu0 %v56
    %284 = vmatprep.subr.mxu0 0.0
    %285 = vmatpush1.msra.mxu0 %v57
    %286 = vmatprep.subr.mxu0 0.0
    %287 = vmatpush1.msra.mxu0 0.0
    %288 = vmatprep.subr.mxu0 0.0
    %289 = vmatpush1.msra.mxu0 0.0
    %290 = vmatprep.subr.mxu0 0.0
    %291 = vmatpush1.msra.mxu0 0.0
    %292 = vmatprep.subr.mxu0 0.0
    %293 = vmatpush1.msra.mxu0 0.0
    %294 = vmatprep.subr.mxu0 0.0
    %295 = vmatpush1.msra.mxu0 0.0
    %296 = vmatprep.subr.mxu0 0.0
    %297 = vmatpush1.msra.mxu0 0.0
    %298 = vmatprep.subr.mxu0 0.0
    %299 = vmatpush1.msra.mxu0 0.0
    %300 = vmatprep.subr.mxu0 0.0
    %301 = vmatpush1.msra.mxu0 0.0
    %302 = vmatprep.subr.mxu0 0.0
    %303 = vmatpush1.msra.mxu0 0.0
    %304 = vmatprep.subr.mxu0 0.0
    %305 = vmatpush1.msra.mxu0 0.0
    %306 = vmatprep.subr.mxu0 0.0
    %307 = vmatpush1.msra.mxu0 0.0
    %308 = vmatprep.subr.mxu0 0.0
    %309 = vmatpush1.msra.mxu0 0.0
    %310 = vmatprep.subr.mxu0 0.0
    %311 = vmatpush1.msra.mxu0 0.0
    %312 = vmatprep.subr.mxu0 0.0
    %313 = vmatpush1.msra.mxu0 0.0
    %314 = vmatprep.subr.mxu0 0.0
    %315 = vmatpush1.msra.mxu0 0.0
    %316 = vmatprep.subr.mxu0 0.0
    %317 = vmatpush1.msra.mxu0 0.0
    %318 = vmatprep.subr.mxu0 0.0
    %319 = vmatpush1.msra.mxu0 0.0
    %320 = vmatprep.subr.mxu0 0.0
    %321 = vmatpush1.msra.mxu0 0.0
    %322 = vmatprep.subr.mxu0 0.0
    %323 = vmatpush1.msra.mxu0 0.0
    %324 = vmatprep.subr.mxu0 0.0
    %325 = vmatpush1.msra.mxu0 0.0
    %326 = vmatprep.subr.mxu0 0.0
    %327 = vmatpush1.msra.mxu0 0.0
    %328 = vmatprep.subr.mxu0 0.0
    %329 = vmatpush1.msra.mxu0 0.0
    %330 = vmatprep.subr.mxu0 0.0
    %331 = vmatpush1.msra.mxu0 0.0
    %332 = vmatprep.subr.mxu0 0.0
    %333 = vmatpush1.msra.mxu0 0.0
    %334 = vmatprep.subr.mxu0 0.0
    %335 = vmatpush1.msra.mxu0 0.0
    %336 = vmatprep.subr.mxu0 0.0
    %337 = vmatpush1.msra.mxu0 0.0
    %338 = vmatprep.subr.mxu0 0.0
    %339 = vmatpush1.msra.mxu0 0.0
    %340 = vmatprep.subr.mxu0 0.0
    %341 = vmatpush1.msra.mxu0 0.0
    %342 = vmatprep.mubr.f32.mxu0 0.0
    %343 = vmatmul.mubr.f32.gmra.mrb[0].mxu0 %v254
    %v344 = vpop.f32.mrb[0].mxu0
    %v345 = vadd.f32 %v196, %v344
    %v346 = vpop.f32.mrb[0].mxu0
    %347 = vmatprep.mubr.f32.mxu0 0.0
    %348 = vmatmul.mubr.f32.gmra.mrb[0].mxu0 %v256
    %v349 = vpop.f32.mrb[0].mxu0
    %v350 = vadd.f32 %v201, %v349
    %v351 = vpop.f32.mrb[0].mxu0
    %352 = vmatprep.mubr.f32.mxu0 0.0
    %353 = vmatmul.mubr.f32.gmra.mrb[0].mxu0 %v258
    %v354 = vpop.f32.mrb[0].mxu0
    %v355 = vadd.f32 %v206, %v354
    %v356 = vpop.f32.mrb[0].mxu0
    %357 = vmatprep.mubr.f32.mxu0 0.0
    %358 = vmatmul.mubr.f32.gmra.mrb[0].mxu0 %v260
    %v359 = vpop.f32.mrb[0].mxu0
    %v360 = vadd.f32 %v211, %v359
    %v361 = vpop.f32.mrb[0].mxu0
    %362 = vmatprep.mubr.f32.mxu0 0.0
    %363 = vmatmul.mubr.f32.gmra.mrb[0].mxu0 %v262
    %v364 = vpop.f32.mrb[0].mxu0
    %v365 = vadd.f32 %v216, %v364
    %v366 = vpop.f32.mrb[0].mxu0
    %367 = vmatprep.mubr.f32.mxu0 0.0
    %368 = vmatmul.mubr.f32.gmra.mrb[0].mxu0 %v264
    %v369 = vpop.f32.mrb[0].mxu0
    %v370 = vadd.f32 %v221, %v369
    %v371 = vpop.f32.mrb[0].mxu0
    %372 = vmatprep.mubr.f32.mxu0 0.0
    %373 = vmatmul.mubr.f32.gmra.mrb[0].mxu0 %v266
    %v374 = vpop.f32.mrb[0].mxu0
    %v375 = vadd.f32 %v226, %v374
    %v376 = vpop.f32.mrb[0].mxu0
    %377 = vmatprep.mubr.f32.mxu0 0.0
    %378 = vmatmul.mubr.f32.gmra.mrb[0].mxu0 %v268
    %v379 = vpop.f32.mrb[0].mxu0
    %v380 = vadd.f32 %v231, %v379
    %v381 = vpop.f32.mrb[0].mxu0
    %382 = vmatprep.mubr.f32.mxu0 0.0
    %383 = vmatmul.mubr.f32.gmra.mrb[0].mxu0 %v270
    %v384 = vpop.f32.mrb[0].mxu0
    %v385 = vadd.f32 %v236, %v384
    %v386 = vpop.f32.mrb[0].mxu0
    %387 = vmatprep.mubr.f32.mxu0 0.0
    %388 = vmatmul.mubr.f32.gmra.mrb[0].mxu0 %v272
    %v389 = vpop.f32.mrb[0].mxu0
    %v390 = vadd.f32 %v241, %v389
    %v391 = vpop.f32.mrb[0].mxu0
    %392 = vmatprep.mubr.f32.mxu0 0.0
    %393 = vmatmul.mubr.f32.gmra.mrb[0].mxu0 %v274
    %v394 = vpop.f32.mrb[0].mxu0
    %v395 = vadd.f32 %v246, %v394
    %v396 = vpop.f32.mrb[0].mxu0
    %397 = vmatprep.mubr.f32.mxu0 0.0
    %398 = vmatmul.mubr.f32.gmra.mrb[0].mxu0 %v276
    %v399 = vpop.f32.mrb[0].mxu0
    %v400 = vadd.f32 %v251, %v399
    %v401 = vpop.f32.mrb[0].mxu0
    %402 = vdwg.mxu0
    %vm403 = vcmask 1045504
    %v404 = vrot.slane %v40, 2
    %v405 = vrot.slane %v41, 2
    %v406 = vsel %vm403, %v404, %v405
    %v407 = vrot.slane %v42, 2
    %v408 = vsel %vm403, %v405, %v407
    %v409 = vrot.slane %v43, 2
    %v410 = vsel %vm403, %v407, %v409
    %v411 = vrot.slane %v44, 2
    %v412 = vsel %vm403, %v409, %v411
    %v413 = vrot.slane %v45, 2
    %v414 = vsel %vm403, %v411, %v413
    %v415 = vrot.slane %v46, 2
    %v416 = vsel %vm403, %v413, %v415
    %v417 = vrot.slane %v47, 2
    %v418 = vrot.slane %v48, 2
    %v419 = vsel %vm403, %v417, %v418
    %v420 = vrot.slane %v49, 2
    %v421 = vsel %vm403, %v418, %v420
    %v422 = vrot.slane %v50, 2
    %v423 = vsel %vm403, %v420, %v422
    %v424 = vrot.slane %v51, 2
    %v425 = vsel %vm403, %v422, %v424
    %v426 = vrot.slane %v52, 2
    %v427 = vsel %vm403, %v424, %v426
    %v428 = vrot.slane %v53, 2
    %v429 = vsel %vm403, %v426, %v428
    %s430 = scalar_lea.vmem [#allocation3], 64
    %v431 = vld [vmem:[%s430] sm:$0xff]
    %v432 = vld [vmem:[%s430 + $0x8] sm:$0xff]
    %v433 = vld [vmem:[%s430 + $0x10] sm:$0xff]
    %v434 = vld [vmem:[%s430 + $0x18] sm:$0xff]
    %v435 = vsel %vm104, %v406, 0
    %v437 = vsel %vm104, %v408, 0
    %v439 = vsel %vm104, %v410, 0
    %v441 = vsel %vm104, %v412, 0
    %v443 = vsel %vm104, %v414, 0
    %v445 = vsel %vm104, %v416, 0
    %v447 = vsel %vm104, %v419, 0
    %v449 = vsel %vm104, %v421, 0
    %v451 = vsel %vm104, %v423, 0
    %v453 = vsel %vm104, %v425, 0
    %v455 = vsel %vm104, %v427, 0
    %v457 = vsel %vm104, %v429, 0
    %459 = vmatprep.subr.mxu0 0.0
    %460 = vmatpush1.msra.mxu0 %v431
    %461 = vmatprep.subr.mxu0 0.0
    %462 = vmatpush1.msra.mxu0 %v432
    %463 = vmatprep.subr.mxu0 0.0
    %464 = vmatpush1.msra.mxu0 %v433
    %465 = vmatprep.subr.mxu0 0.0
    %466 = vmatpush1.msra.mxu0 %v434
    %467 = vmatprep.subr.mxu0 0.0
    %468 = vmatpush1.msra.mxu0 0.0
    %469 = vmatprep.subr.mxu0 0.0
    %470 = vmatpush1.msra.mxu0 0.0
    %471 = vmatprep.subr.mxu0 0.0
    %472 = vmatpush1.msra.mxu0 0.0
    %473 = vmatprep.subr.mxu0 0.0
    %474 = vmatpush1.msra.mxu0 0.0
    %475 = vmatprep.subr.mxu0 0.0
    %476 = vmatpush1.msra.mxu0 0.0
    %477 = vmatprep.subr.mxu0 0.0
    %478 = vmatpush1.msra.mxu0 0.0
    %479 = vmatprep.subr.mxu0 0.0
    %480 = vmatpush1.msra.mxu0 0.0
    %481 = vmatprep.subr.mxu0 0.0
    %482 = vmatpush1.msra.mxu0 0.0
    %483 = vmatprep.subr.mxu0 0.0
    %484 = vmatpush1.msra.mxu0 0.0
    %485 = vmatprep.subr.mxu0 0.0
    %486 = vmatpush1.msra.mxu0 0.0
    %487 = vmatprep.subr.mxu0 0.0
    %488 = vmatpush1.msra.mxu0 0.0
    %489 = vmatprep.subr.mxu0 0.0
    %490 = vmatpush1.msra.mxu0 0.0
    %491 = vmatprep.subr.mxu0 0.0
    %492 = vmatpush1.msra.mxu0 0.0
    %493 = vmatprep.subr.mxu0 0.0
    %494 = vmatpush1.msra.mxu0 0.0
    %495 = vmatprep.subr.mxu0 0.0
    %496 = vmatpush1.msra.mxu0 0.0
    %497 = vmatprep.subr.mxu0 0.0
    %498 = vmatpush1.msra.mxu0 0.0
    %499 = vmatprep.subr.mxu0 0.0
    %500 = vmatpush1.msra.mxu0 0.0
    %501 = vmatprep.subr.mxu0 0.0
    %502 = vmatpush1.msra.mxu0 0.0
    %503 = vmatprep.subr.mxu0 0.0
    %504 = vmatpush1.msra.mxu0 0.0
    %505 = vmatprep.subr.mxu0 0.0
    %506 = vmatpush1.msra.mxu0 0.0
    %507 = vmatprep.subr.mxu0 0.0
    %508 = vmatpush1.msra.mxu0 0.0
    %509 = vmatprep.subr.mxu0 0.0
    %510 = vmatpush1.msra.mxu0 0.0
    %511 = vmatprep.subr.mxu0 0.0
    %512 = vmatpush1.msra.mxu0 0.0
    %513 = vmatprep.subr.mxu0 0.0
    %514 = vmatpush1.msra.mxu0 0.0
    %515 = vmatprep.subr.mxu0 0.0
    %516 = vmatpush1.msra.mxu0 0.0
    %517 = vmatprep.subr.mxu0 0.0
    %518 = vmatpush1.msra.mxu0 0.0
    %519 = vmatprep.subr.mxu0 0.0
    %520 = vmatpush1.msra.mxu0 0.0
    %521 = vmatprep.subr.mxu0 0.0
    %522 = vmatpush1.msra.mxu0 0.0
    %523 = vmatprep.mubr.f32.mxu0 0.0
    %524 = vmatmul.mubr.f32.gmra.mrb[0].mxu0 %v435
    %v525 = vpop.f32.mrb[0].mxu0
    %v526 = vadd.f32 0.0, %v525
    %v527 = vpop.f32.mrb[0].mxu0
    %528 = vmatprep.mubr.f32.mxu0 0.0
    %529 = vmatmul.mubr.f32.gmra.mrb[0].mxu0 %v437
    %v530 = vpop.f32.mrb[0].mxu0
    %v531 = vadd.f32 0.0, %v530
    %v532 = vpop.f32.mrb[0].mxu0
    %533 = vmatprep.mubr.f32.mxu0 0.0
    %534 = vmatmul.mubr.f32.gmra.mrb[0].mxu0 %v439
    %v535 = vpop.f32.mrb[0].mxu0
    %v536 = vadd.f32 0.0, %v535
    %v537 = vpop.f32.mrb[0].mxu0
    %538 = vmatprep.mubr.f32.mxu0 0.0
    %539 = vmatmul.mubr.f32.gmra.mrb[0].mxu0 %v441
    %v540 = vpop.f32.mrb[0].mxu0
    %v541 = vadd.f32 0.0, %v540
    %v542 = vpop.f32.mrb[0].mxu0
    %543 = vmatprep.mubr.f32.mxu0 0.0
    %544 = vmatmul.mubr.f32.gmra.mrb[0].mxu0 %v443
    %v545 = vpop.f32.mrb[0].mxu0
    %v546 = vadd.f32 0.0, %v545
    %v547 = vpop.f32.mrb[0].mxu0
    %548 = vmatprep.mubr.f32.mxu0 0.0
    %549 = vmatmul.mubr.f32.gmra.mrb[0].mxu0 %v445
    %v550 = vpop.f32.mrb[0].mxu0
    %v551 = vadd.f32 0.0, %v550
    %v552 = vpop.f32.mrb[0].mxu0
    %553 = vmatprep.mubr.f32.mxu0 0.0
    %554 = vmatmul.mubr.f32.gmra.mrb[0].mxu0 %v447
    %v555 = vpop.f32.mrb[0].mxu0
    %v556 = vadd.f32 0.0, %v555
    %v557 = vpop.f32.mrb[0].mxu0
    %558 = vmatprep.mubr.f32.mxu0 0.0
    %559 = vmatmul.mubr.f32.gmra.mrb[0].mxu0 %v449
    %v560 = vpop.f32.mrb[0].mxu0
    %v561 = vadd.f32 0.0, %v560
    %v562 = vpop.f32.mrb[0].mxu0
    %563 = vmatprep.mubr.f32.mxu0 0.0
    %564 = vmatmul.mubr.f32.gmra.mrb[0].mxu0 %v451
    %v565 = vpop.f32.mrb[0].mxu0
    %v566 = vadd.f32 0.0, %v565
    %v567 = vpop.f32.mrb[0].mxu0
    %568 = vmatprep.mubr.f32.mxu0 0.0
    %569 = vmatmul.mubr.f32.gmra.mrb[0].mxu0 %v453
    %v570 = vpop.f32.mrb[0].mxu0
    %v571 = vadd.f32 0.0, %v570
    %v572 = vpop.f32.mrb[0].mxu0
    %573 = vmatprep.mubr.f32.mxu0 0.0
    %574 = vmatmul.mubr.f32.gmra.mrb[0].mxu0 %v455
    %v575 = vpop.f32.mrb[0].mxu0
    %v576 = vadd.f32 0.0, %v575
    %v577 = vpop.f32.mrb[0].mxu0
    %578 = vmatprep.mubr.f32.mxu0 0.0
    %579 = vmatmul.mubr.f32.gmra.mrb[0].mxu0 %v457
    %v580 = vpop.f32.mrb[0].mxu0
    %v581 = vadd.f32 0.0, %v580
    %v582 = vpop.f32.mrb[0].mxu0
    %583 = vdwg.mxu0
    %v584 = vadd.f32 %v345, %v526
    %v585 = vadd.f32 %v350, %v531
    %v586 = vadd.f32 %v355, %v536
    %v587 = vadd.f32 %v360, %v541
    %v588 = vadd.f32 %v365, %v546
    %v589 = vadd.f32 %v370, %v551
    %v590 = vadd.f32 %v375, %v556
    %v591 = vadd.f32 %v380, %v561
    %v592 = vadd.f32 %v385, %v566
    %v593 = vadd.f32 %v390, %v571
    %v594 = vadd.f32 %v395, %v576
    %v595 = vadd.f32 %v400, %v581
    %v596 = vld [vmem:[%s2] sm:$0x1]
    %v598 = vlaneseq
    %v599 = vshrl.u32 %v598, 7
    %v600 = vsub.s32 0, %v599
    %v601 = vrot.slane %v596, %v600
    %v603 = vadd.f32 %v584, %v601
    %v604 = vadd.f32 %v585, %v601
    %v605 = vadd.f32 %v586, %v601
    %v606 = vadd.f32 %v587, %v601
    %v607 = vadd.f32 %v588, %v601
    %v608 = vadd.f32 %v589, %v601
    %v609 = vadd.f32 %v590, %v601
    %v610 = vadd.f32 %v591, %v601
    %v611 = vadd.f32 %v592, %v601
    %v612 = vadd.f32 %v593, %v601
    %v613 = vadd.f32 %v594, %v601
    %v614 = vadd.f32 %v595, %v601
    %v615 = vmax.f32 %v603, 0.0
    %v616 = vmax.f32 %v604, 0.0
    %v617 = vmax.f32 %v605, 0.0
    %v618 = vmax.f32 %v606, 0.0
    %v619 = vmax.f32 %v607, 0.0
    %v620 = vmax.f32 %v608, 0.0
    %v621 = vmax.f32 %v609, 0.0
    %v622 = vmax.f32 %v610, 0.0
    %v623 = vmax.f32 %v611, 0.0
    %v624 = vmax.f32 %v612, 0.0
    %v625 = vmax.f32 %v613, 0.0
    %v626 = vmax.f32 %v614, 0.0
    %s627 = smul.u32 0, 48
    %v628 = vlaneseq
    %v629 = vshrl.u32 %v628, 7
    %v630 = vadd.s32 %v629, 8
    %v631 = vadd.s32 %v629, 16
    %v632 = vadd.s32 %v629, 24
    %v633 = vadd.s32 %v629, 32
    %v634 = vadd.s32 %v629, 40
    %v635 = vstv %s627
    %v636 = vadd.s32 %v635, %v629
    %v637 = vadd.s32 %v635, %v630
    %v638 = vadd.s32 %v635, %v631
    %v639 = vadd.s32 %v635, %v632
    %v640 = vadd.s32 %v635, %v633
    %v641 = vadd.s32 %v635, %v634
    %vm642 = vcmp.lt.s32.totalorder %v636, 40
    %vm643 = vcmp.lt.s32.totalorder %v637, 40
    %vm644 = vcmp.lt.s32.totalorder %v638, 40
    %vm645 = vcmp.lt.s32.totalorder %v639, 40
    %vm646 = vcmp.lt.s32.totalorder %v640, 40
    %vm647 = vcmp.lt.s32.totalorder %v641, 40
    %v648 = vsel %vm642, 1, 0
    %v649 = vsel %vm643, 1, 0
    %v650 = vsel %vm644, 1, 0
    %v651 = vsel %vm645, 1, 0
    %v652 = vsel %vm646, 1, 0
    %v653 = vsel %vm647, 1, 0
    %vm654 = vcmp.eq.s32.totalorder %v648, 1
    %vm655 = vcmp.eq.s32.totalorder %v649, 1
    %vm656 = vcmp.eq.s32.totalorder %v650, 1
    %vm657 = vcmp.eq.s32.totalorder %v651, 1
    %vm658 = vcmp.eq.s32.totalorder %v652, 1
    %vm659 = vcmp.eq.s32.totalorder %v653, 1
    %v660 = vsel %vm654, %v615, 0.0
    %v661 = vsel %vm655, %v616, 0.0
    %v662 = vsel %vm656, %v617, 0.0
    %v663 = vsel %vm657, %v618, 0.0
    %v664 = vsel %vm658, %v619, 0.0
    %v665 = vsel %vm659, %v620, 0.0
    %v666 = vsel %vm654, %v621, 0.0
    %v667 = vsel %vm655, %v622, 0.0
    %v668 = vsel %vm656, %v623, 0.0
    %v669 = vsel %vm657, %v624, 0.0
    %v670 = vsel %vm658, %v625, 0.0
    %v671 = vsel %vm659, %v626, 0.0
    %v672 = vld [vmem:[#allocation2] sm:$0x3]
    %v673 = vmax.f32 %v660, %v662
    %v674 = vmax.f32 %v661, %v663
    %v675 = vmax.f32 %v673, %v664
    %v676 = vmax.f32 %v674, %v665
    %v677 = vmax.f32 %v675, %v676
    %v678 = vrot.slane %v677, 4
    %v679 = vmax.f32 %v677, %v678
    %v680 = vrot.slane %v679, 2
    %v681 = vmax.f32 %v679, %v680
    %v682 = vrot.slane %v681, 1
    %v683 = vmax.f32 %v681, %v682
    %v684 = vmax.f32 %v666, %v668
    %v685 = vmax.f32 %v667, %v669
    %v686 = vmax.f32 %v684, %v670
    %v687 = vmax.f32 %v685, %v671
    %v688 = vmax.f32 %v686, %v687
    %v689 = vrot.slane %v688, 4
    %v690 = vmax.f32 %v688, %v689
    %v691 = vrot.slane %v690, 2
    %v692 = vmax.f32 %v690, %v691
    %v693 = vrot.slane %v692, 1
    %v694 = vmax.f32 %v692, %v693
    %vm697 = vcmask 1041409
    %v698 = vsel %vm697, %v694, %v683
    %v700 = vmax.f32 %v672, %v698
    %701 = vst [vmem:[#allocation2] sm:$0x3] %v700
    // Predicated region
    $region30: #{tpu_custom_call.1} parent=1 // pred_check
      %p702 = pneg %p35
    $region31: #{tpu_custom_call.1} parent=1 // pred_check_branch
      %704 = sbr.rel (%p702) target = $region33
    $region32: #{tpu_custom_call.1} parent=1 // pred_region
      %v705 = vld [vmem:[#allocation2] sm:$0x3]
      %v706 = vld [vmem:[%s3] sm:$0xff]
      %v707 = vld [vmem:[%s3 + $0x8] sm:$0xff]
      %v708 = vld [vmem:[%s3 + $0x10] sm:$0xff]
      %v709 = vld [vmem:[%s3 + $0x18] sm:$0xff]
      %v710 = vld [vmem:[%s3 + $0x20] sm:$0xff]
      %v711 = vld [vmem:[%s3 + $0x28] sm:$0xff]
      %v712 = vld [vmem:[%s3 + $0x30] sm:$0xff]
      %v713 = vld [vmem:[%s3 + $0x38] sm:$0xff]
      %v714 = vld [vmem:[%s3 + $0x40] sm:$0xff]
      %v715 = vld [vmem:[%s3 + $0x48] sm:$0xff]
      %v716 = vld [vmem:[%s3 + $0x50] sm:$0xff]
      %v717 = vld [vmem:[%s3 + $0x58] sm:$0xff]
      %v718 = vld [vmem:[%s3 + $0x60] sm:$0xff]
      %v719 = vld [vmem:[%s3 + $0x68] sm:$0xff]
      %v720 = vld [vmem:[%s3 + $0x70] sm:$0xff]
      %v721 = vld [vmem:[%s3 + $0x78] sm:$0xff]
      %v722 = vld [vmem:[%s4] sm:$0x1]
      %v724 = vlaneseq
      %v725 = vshrl.u32 %v724, 7
      %v726 = vsub.s32 0, %v725
      %v727 = vrot.slane %v722, %v726
      %729 = vmatprep.subr.mxu0 0.0
      %730 = vmatpush1.msra.mxu0 %v706
      %731 = vmatprep.subr.mxu0 0.0
      %732 = vmatpush1.msra.mxu0 %v707
      %733 = vmatprep.subr.mxu0 0.0
      %734 = vmatpush1.msra.mxu0 %v708
      %735 = vmatprep.subr.mxu0 0.0
      %736 = vmatpush1.msra.mxu0 %v709
      %737 = vmatprep.subr.mxu0 0.0
      %738 = vmatpush1.msra.mxu0 %v710
      %739 = vmatprep.subr.mxu0 0.0
      %740 = vmatpush1.msra.mxu0 %v711
      %741 = vmatprep.subr.mxu0 0.0
      %742 = vmatpush1.msra.mxu0 %v712
      %743 = vmatprep.subr.mxu0 0.0
      %744 = vmatpush1.msra.mxu0 %v713
      %745 = vmatprep.subr.mxu0 0.0
      %746 = vmatpush1.msra.mxu0 %v714
      %747 = vmatprep.subr.mxu0 0.0
      %748 = vmatpush1.msra.mxu0 %v715
      %749 = vmatprep.subr.mxu0 0.0
      %750 = vmatpush1.msra.mxu0 %v716
      %751 = vmatprep.subr.mxu0 0.0
      %752 = vmatpush1.msra.mxu0 %v717
      %753 = vmatprep.subr.mxu0 0.0
      %754 = vmatpush1.msra.mxu0 %v718
      %755 = vmatprep.subr.mxu0 0.0
      %756 = vmatpush1.msra.mxu0 %v719
      %757 = vmatprep.subr.mxu0 0.0
      %758 = vmatpush1.msra.mxu0 %v720
      %759 = vmatprep.subr.mxu0 0.0
      %760 = vmatpush1.msra.mxu0 %v721
      %761 = vmatprep.subr.mxu0 0.0
      %762 = vmatpush1.msra.mxu0 0.0
      %763 = vmatprep.subr.mxu0 0.0
      %764 = vmatpush1.msra.mxu0 0.0
      %765 = vmatprep.subr.mxu0 0.0
      %766 = vmatpush1.msra.mxu0 0.0
      %767 = vmatprep.subr.mxu0 0.0
      %768 = vmatpush1.msra.mxu0 0.0
      %769 = vmatprep.subr.mxu0 0.0
      %770 = vmatpush1.msra.mxu0 0.0
      %771 = vmatprep.subr.mxu0 0.0
      %772 = vmatpush1.msra.mxu0 0.0
      %773 = vmatprep.subr.mxu0 0.0
      %774 = vmatpush1.msra.mxu0 0.0
      %775 = vmatprep.subr.mxu0 0.0
      %776 = vmatpush1.msra.mxu0 0.0
      %777 = vmatprep.subr.mxu0 0.0
      %778 = vmatpush1.msra.mxu0 0.0
      %779 = vmatprep.subr.mxu0 0.0
      %780 = vmatpush1.msra.mxu0 0.0
      %781 = vmatprep.subr.mxu0 0.0
      %782 = vmatpush1.msra.mxu0 0.0
      %783 = vmatprep.subr.mxu0 0.0
      %784 = vmatpush1.msra.mxu0 0.0
      %785 = vmatprep.subr.mxu0 0.0
      %786 = vmatpush1.msra.mxu0 0.0
      %787 = vmatprep.subr.mxu0 0.0
      %788 = vmatpush1.msra.mxu0 0.0
      %789 = vmatprep.subr.mxu0 0.0
      %790 = vmatpush1.msra.mxu0 0.0
      %791 = vmatprep.subr.mxu0 0.0
      %792 = vmatpush1.msra.mxu0 0.0
      %793 = vmatprep.mubr.f32.mxu0 0.0
      %794 = vmatmul.mubr.f32.gmra.mrb[0].mxu0 %v705
      %v795 = vpop.f32.mrb[0].mxu0
      %v796 = vadd.f32 %v727, %v795
      %v797 = vpop.f32.mrb[0].mxu0
      %798 = vdwg.mxu0
      %799 = vst [vmem:[#allocation6] sm:$0x3] %v796
    $region33: #{tpu_custom_call.1} parent=1 // pred_fallthru
      _
    // Predicated region
    $region34: #{tpu_custom_call.1} parent=1 // pred_check
      _
    $region35: #{tpu_custom_call.1} parent=1 // pred_check_branch
      %801 = sbr.rel (0) target = $region37
    $region36: #{tpu_custom_call.1} parent=1 // pred_region
      %s803 = ssub.s32 32, 32
      %804 = vsyncadd [#allocation5], %s803
      %s806 = sshll.u32 [#allocation6], 4
      %s807 = int_to_ptr.vmem [resolvable:$true] %s806
      %809 = dma.vmem_to_hbm [thread:$0]  %s807, 32, %s5, [#allocation5]
    $region37: #{tpu_custom_call.1} parent=1 // pred_fallthru
      _
    // Predicated region
    $region38: #{tpu_custom_call.1} parent=1 // pred_check
      _
    $region39: #{tpu_custom_call.1} parent=1 // pred_check_branch
      %811 = sbr.rel (0) target = $region41
    $region40: #{tpu_custom_call.1} parent=1 // pred_region
      %812 = dma.done [#allocation5], 32
    $region41: #{tpu_custom_call.1} parent=1 // pred_fallthru
      _
    %813 = vsyncpa [#allocation4], 1
    %814 = vsyncpa [#allocation5], 1

</llo_original>
